<compile_context>
chip_gen: v6e
topology: v6e:2x2x1
jax: 0.10.0
libtpu: 0.0.40
codegen_flags: <defaults>
</compile_context>

<pallas_src>
import functools

import jax
import jax.numpy as jnp
from jax.experimental import pallas as pl
from jax.experimental.pallas import tpu as pltpu


_NEG_BIG = -1e30  # finite "minus infinity": padded columns never produce NaNs


def _ceil_to(v, m):
    return -(-v // m) * m


def _dot_bt(a, b):
    """a @ b.T on the MXU (f32 accumulation), no materialized transpose."""
    return jax.lax.dot_general(
        a, b, (((1,), (1,)), ((), ())), preferred_element_type=jnp.float32)


def _row_lse(a):
    m = jnp.max(a, axis=-1, keepdims=True)
    return m + jnp.log(jnp.sum(jnp.exp(a - m), axis=-1, keepdims=True))


def _finalize(xs_raw, ys_raw, zs_raw, row0, out_ref, *, inv_t, tm, b_valid,
              b_pad, similarity_adjust, lane_out):
    xs = xs_raw * inv_t
    ys = ys_raw * inv_t

    need_cols = (b_valid != b_pad) or (not similarity_adjust)
    cols = (jax.lax.broadcasted_iota(jnp.int32, (tm, b_pad), 1)
            if need_cols else None)
    col_ok = None
    if b_valid != b_pad:                       # mask padded columns (reused below)
        col_ok = cols < b_valid
        xs = jnp.where(col_ok, xs, _NEG_BIG)
        ys = jnp.where(col_ok, ys, _NEG_BIG)

    lse_x = _row_lse(xs)                       # (tm, 1) row-LSE of xsim
    lse_y = _row_lse(ys)                       # (tm, 1) column-LSE of xsim
    xy = xs + ys

    if similarity_adjust:
        zs = zs_raw * (0.5 * inv_t)
        if col_ok is not None:
            zs = jnp.where(col_ok, zs, _NEG_BIG)
        zm = jnp.max(zs, axis=-1, keepdims=True)
        ez = jnp.exp(zs - zm)
        den = jnp.sum(ez, axis=-1, keepdims=True)
        # sum(softmax(zs) * (xs + ys)) — single fused row reduction, exact divide
        tdot = jnp.sum(ez * xy, axis=-1, keepdims=True) / den
    else:
        # hard labels arange(B): CE = lse - diagonal (no BxB one-hot built)
        rows = jax.lax.broadcasted_iota(jnp.int32, (tm, b_pad), 0) + row0
        tdot = jnp.sum(jnp.where(rows == cols, xy, 0.0),
                       axis=-1, keepdims=True)

    loss = 0.5 * (lse_x + lse_y - tdot)        # (tm, 1)

    if b_valid != b_pad:                       # zero padded rows -> wrapper sums / B
        rvec = jax.lax.broadcasted_iota(jnp.int32, (tm, 1), 0) + row0
        loss = jnp.where(rvec < b_valid, loss, 0.0)

    if lane_out:
        # Lane-dense (1, tm) store: relayout the per-row column into a row via a
        # select + sublane reduction (robust; avoids a general (tm,1) transpose).
        eye = (jax.lax.broadcasted_iota(jnp.int32, (128, 128), 0) ==
               jax.lax.broadcasted_iota(jnp.int32, (128, 128), 1))
        for c0 in range(0, tm, 128):
            blk = jnp.broadcast_to(loss[c0:c0 + 128, :], (128, 128))
            out_ref[:, c0:c0 + 128] = jnp.sum(
                jnp.where(eye, blk, 0.0), axis=0, keepdims=True)
    else:
        out_ref[...] = loss


def _loss_kernel(x_ref, y_ref, out_ref, *accs, inv_t, tm, b_valid, b_pad,
                 similarity_adjust, n_k, lane_out):
    row0 = pl.multiple_of(pl.program_id(0) * tm, tm)

    x_all = x_ref[...]                          # (b_pad, tk), input dtype
    y_all = y_ref[...]
    if b_pad == tm:                             # single row block: no slicing
        x_i, y_i = x_all, y_all
    else:
        x_i = x_ref[pl.ds(row0, tm), :]         # (tm, tk)
        y_i = y_ref[pl.ds(row0, tm), :]

    xs_new = _dot_bt(x_i, y_all)                # rows of X @ Y^T
    ys_new = _dot_bt(y_i, x_all)                # rows of Y @ X^T == cols of X @ Y^T
    zs_new = (_dot_bt(x_i, x_all) + _dot_bt(y_i, y_all)
              if similarity_adjust else None)   # fused grams

    fin = functools.partial(
        _finalize, row0=row0, out_ref=out_ref, inv_t=inv_t, tm=tm,
        b_valid=b_valid, b_pad=b_pad, similarity_adjust=similarity_adjust,
        lane_out=lane_out)

    if n_k == 1:                                # no K streaming: no scratch RMW at all
        fin(xs_new, ys_new, zs_new)
        return

    if similarity_adjust:
        xs_acc, ys_acc, zs_acc = accs
    else:
        (xs_acc, ys_acc), zs_acc = accs, None

    k = pl.program_id(1)

    @pl.when(k == 0)                            # first chunk writes: no zero-init pass
    def _first():
        xs_acc[...] = xs_new
        ys_acc[...] = ys_new
        if zs_acc is not None:
            zs_acc[...] = zs_new

    if n_k > 2:
        @pl.when((k > 0) & (k < n_k - 1))
        def _accum():
            xs_acc[...] += xs_new
            ys_acc[...] += ys_new
            if zs_acc is not None:
                zs_acc[...] += zs_new

    @pl.when(k == n_k - 1)                      # fold the last chunk into finalize
    def _fin():
        fin(xs_acc[...] + xs_new,
            ys_acc[...] + ys_new,
            (zs_acc[...] + zs_new) if zs_acc is not None else None)


def _vmem_capacity_bytes():
    try:
        cap = int(getattr(pltpu.get_tpu_info(), "vmem_capacity_bytes", 0) or 0)
        if cap >= (8 << 20):
            return cap
    except Exception:
        pass
    return 64 << 20                             # conservative: fits every generation


def _select_row_tiling(b, sublane, n_acc, acc_budget, two_core):
    """Returns (tm, b_pad, lane_out)."""
    acc_unit = (n_acc + 3) * 4                  # f32 accumulators + live epilogue temps
    b_pad_sub = _ceil_to(b, sublane)
    single_fits = acc_unit * b_pad_sub * b_pad_sub <= acc_budget

    if b <= 128 or (not two_core and single_fits):
        return b_pad_sub, b_pad_sub, False      # one resident row block (min HBM reads)

    if two_core and single_fits:
        # Split into >= 2 row blocks so both v7x TensorCores get work.
        for cand in (512, 256, 128):
            bp = _ceil_to(b, cand)
            if (2 * cand <= bp and bp * bp <= 1.5 * b_pad_sub * b_pad_sub
                    and acc_unit * cand * bp <= acc_budget):
                return cand, bp, True
        tm = _ceil_to(-(-b // 2), sublane)      # 2 blocks, minimal row padding
        return tm, 2 * tm, False

    # Large batch: stream row blocks; biggest 128-multiple tm whose accumulators
    # (plus epilogue temporaries) fit the generation-aware VMEM budget.
    b_pad = _ceil_to(b, 128)
    for cand in (512, 256, 128):
        bp = _ceil_to(b, cand)
        if (2 * cand <= bp and bp * bp <= 1.1 * b_pad * b_pad
                and acc_unit * cand * bp <= acc_budget):
            return cand, bp, True
    # TODO(synk): column-blocked online-LSE finalize for batches whose (128, B)
    # accumulators still overflow VMEM (very large B on v7x).
    return 128, b_pad, True


def bimodal_contrastive_loss(x, y, *, temperature, similarity_adjust=True,
                             loss_flood=None, compute_dtype=None,
                             force_tm=None, max_tk=None):
    assert x.shape == y.shape and x.ndim == 2
    assert x.dtype == y.dtype
    if compute_dtype is not None:               # optional bf16 MXU path (opt-in)
        x = x.astype(compute_dtype)
        y = y.astype(compute_dtype)
    b, d = x.shape
    itemsize = jnp.dtype(x.dtype).itemsize
    sublane = max(8, 32 // itemsize)            # 8 (f32) / 16 (bf16) / 32 (int8, fp8)
    n_acc = 3 if similarity_adjust else 2

    # ---- generation-aware VMEM budget (128 MiB v5e/v6e, 64 MiB v7x) ----------
    vmem_cap = _vmem_capacity_bytes()
    vmem_budget = int(vmem_cap * 0.85)          # headroom for Mosaic internal scratch
    acc_budget = int(vmem_budget * 0.45)        # accumulators + epilogue temporaries
    two_core = vmem_cap < (96 << 20)            # v7x-class part: 2 TensorCores / chip

    # ---- row tiling -----------------------------------------------------------
    if force_tm is not None:                    # testing hook: force the row tile
        tm = int(force_tm)
        assert tm % sublane == 0
        b_pad = _ceil_to(b, tm)
        lane_out = (b_pad > tm) and (tm % 128 == 0)
    else:
        tm, b_pad, lane_out = _select_row_tiling(
            b, sublane, n_acc, acc_budget, two_core)
    n_i = b_pad // tm

    # ---- K tiling: lane-dense chunks of D, sized so the double-buffered
    # (b_pad, tk) X/Y slabs fit what is left of the VMEM budget -----------------
    acc_bytes = (n_acc + 3) * 4 * tm * b_pad
    slab_budget = max(vmem_budget - acc_bytes, 8 << 20)
    tk_cap = max(128, (slab_budget // (4 * b_pad * itemsize)) // 128 * 128)
    tk_pref = 2048 if itemsize <= 2 else 1024   # raised past 512 (review item)
    tk_max = min(tk_pref, tk_cap)
    if max_tk is not None:                      # testing hook: force K streaming
        tk_max = min(tk_max, max(128, (int(max_tk) // 128) * 128))
    if d <= tk_max:
        tk, d_pad = d, d                        # single K chunk (full-dim block)
    else:
        n_k = -(-d // tk_max)
        tk = _ceil_to(-(-d // n_k), 128)        # bounded D padding
        d_pad = n_k * tk
    n_k = d_pad // tk

    if (b_pad, d_pad) != (b, d):
        x = jnp.pad(x, ((0, b_pad - b), (0, d_pad - d)))
        y = jnp.pad(y, ((0, b_pad - b), (0, d_pad - d)))

    kernel = functools.partial(
        _loss_kernel,
        inv_t=1.0 / float(temperature),
        tm=tm, b_valid=b, b_pad=b_pad,
        similarity_adjust=bool(similarity_adjust),
        n_k=n_k, lane_out=lane_out)

    scratch = ([pltpu.VMEM((tm, b_pad), jnp.float32)] * n_acc) if n_k > 1 else []

    if lane_out:                                # lane-dense per-row loss output
        out_shape = jax.ShapeDtypeStruct((1, b_pad), jnp.float32)
        out_spec = pl.BlockSpec((1, tm), lambda i, k: (0, i))
    else:
        out_shape = jax.ShapeDtypeStruct((b_pad, 1), jnp.float32)
        out_spec = pl.BlockSpec((tm, 1), lambda i, k: (i, 0))

    vmem_need = acc_bytes + 4 * b_pad * tk * itemsize + 8 * b_pad + (2 << 20)
    vmem_limit = int(min(vmem_cap - (1 << 20),
                         max(int(vmem_need * 1.25), 32 << 20)))

    n_mm = 4 if similarity_adjust else 2
    cost = pl.CostEstimate(
        flops=int(n_mm * 2 * b_pad * b_pad * d_pad),
        transcendentals=int((3 if similarity_adjust else 2) * b_pad * b_pad),
        bytes_accessed=int(n_i * 2 * b_pad * d_pad * itemsize + 4 * b_pad))

    per_row = pl.pallas_call(
        kernel,
        out_shape=out_shape,
        grid_spec=pltpu.PrefetchScalarGridSpec(
            num_scalar_prefetch=0,
            grid=(n_i, n_k),
            in_specs=[
                pl.BlockSpec((b_pad, tk), lambda i, k: (0, k)),
                pl.BlockSpec((b_pad, tk), lambda i, k: (0, k)),
            ],
            out_specs=out_spec,
            scratch_shapes=scratch),
        compiler_params=pltpu.CompilerParams(
            dimension_semantics=("parallel", "arbitrary"),
            vmem_limit_bytes=vmem_limit),
        cost_estimate=cost,
    )(x, y)

    # padded rows were zeroed in-kernel; mean over the B valid rows only
    loss = jnp.sum(per_row.reshape(-1)[:b]) / b
    if loss_flood:  # NB: Python truthiness — matches the reference module exactly
        loss = jnp.abs(loss - loss_flood) + loss_flood
    return loss


def _reference_loss(x, y, *, temperature, similarity_adjust=True,
                    loss_flood=None):
    x = x.astype(jnp.float32)
    y = y.astype(jnp.float32)
    xsim = (x @ y.T) / temperature
    if similarity_adjust:
        target = jax.nn.softmax((x @ x.T + y @ y.T) / (2.0 * temperature), axis=-1)
        x_loss = jnp.mean(-jnp.sum(target * jax.nn.log_softmax(xsim, -1), axis=-1))
        y_loss = jnp.mean(-jnp.sum(target * jax.nn.log_softmax(xsim.T, -1), axis=-1))
    else:
        lbl = jnp.arange(x.shape[0])
        x_loss = jnp.mean(-jax.nn.log_softmax(xsim, -1)[lbl, lbl])
        y_loss = jnp.mean(-jax.nn.log_softmax(xsim.T, -1)[lbl, lbl])
    loss = (x_loss + y_loss) / 2.0
    if loss_flood:
        loss = jnp.abs(loss - loss_flood) + loss_flood
    return loss


if __name__ == "__main__":
    def make_inputs(key, b, d, dtype=jnp.float32):
        kx, ky = jax.random.split(key)
        xx = jax.random.normal(kx, (b, d), dtype=jnp.float32)
        yy = jax.random.normal(ky, (b, d), dtype=jnp.float32)
        xx = xx / jnp.linalg.norm(xx, axis=-1, keepdims=True)
        yy = yy / jnp.linalg.norm(yy, axis=-1, keepdims=True)
        return xx.astype(dtype), yy.astype(dtype)

    cases = [
        dict(b=16, d=64, sim=True, flood=None),                       # single block
        dict(b=16, d=64, sim=False, flood=None),                      # hard-label path
        dict(b=12, d=40, sim=True, flood=2.0),                        # row/col padding + flooding
        dict(b=12, d=40, sim=False, flood=2.0),                       # hard-label + padding
        dict(b=320, d=768, sim=True, flood=None),                     # auto tile selection
        dict(b=256, d=96, sim=True, flood=None, force_tm=128),        # multi row blocks, lane-dense out
        dict(b=256, d=96, sim=False, flood=None, force_tm=128),       # multi blocks, hard labels
        dict(b=256, d=320, sim=True, flood=None, force_tm=128, max_tk=128),  # + K streaming
        dict(b=200, d=96, sim=True, flood=None, force_tm=104),        # 2-core style split, column out
        dict(b=256, d=96, sim=True, flood=None, force_tm=128, dtype=jnp.bfloat16),  # bf16 MXU path
    ]

    key = jax.random.PRNGKey(0)
    for i, c in enumerate(cases):
        key, sub = jax.random.split(key)
        dtype = c.get("dtype", jnp.float32)
        x, y = make_inputs(sub, c["b"], c["d"], dtype)
        got = bimodal_contrastive_loss(
            x, y, temperature=0.1,
            similarity_adjust=c["sim"], loss_flood=c["flood"],
            force_tm=c.get("force_tm"), max_tk=c.get("max_tk"))
        got = jax.block_until_ready(got)
        ref = _reference_loss(
            x, y, temperature=0.1,
            similarity_adjust=c["sim"], loss_flood=c["flood"])
        tol = 1e-3 if dtype == jnp.bfloat16 else 2e-4
        assert jnp.allclose(got, ref, rtol=tol, atol=tol), (i, float(got), float(ref))

    print("KERNEL_OK")
</pallas_src>

<mosaic_0001>
module attributes {stable_mosaic.version = 11 : i64} {
  func.func @_loss_kernel(%arg0: i32, %arg1: i32, %arg2: memref<16x64xf32, #tpu.memory_space<vmem>>, %arg3: memref<16x64xf32, #tpu.memory_space<vmem>>, %arg4: memref<16x1xf32, #tpu.memory_space<vmem>>) attributes {dimension_semantics = [#tpu.dimension_semantics<parallel>, #tpu.dimension_semantics<arbitrary>], iteration_bounds = array<i64: 1, 1>, scalar_prefetch = 0 : i64, scratch_operands = 0 : i64, tpu.core_type = #tpu.core_type<tc>, window_params = [{transform_indices = @transform_0, window_bounds = array<i64: 16, 64>}, {transform_indices = @transform_1, window_bounds = array<i64: 16, 64>}, {transform_indices = @transform_2, window_bounds = array<i64: 16, 1>}]} {
    %c0 = arith.constant 0 : index
    %c0_0 = arith.constant 0 : index
    %0 = vector.load %arg2[%c0, %c0_0] : memref<16x64xf32, #tpu.memory_space<vmem>>, vector<16x64xf32>
    %c0_1 = arith.constant 0 : index
    %c0_2 = arith.constant 0 : index
    %1 = vector.load %arg3[%c0_1, %c0_2] : memref<16x64xf32, #tpu.memory_space<vmem>>, vector<16x64xf32>
    %cst = arith.constant dense<0.000000e+00> : vector<16x16xf32>
    %2 = tpu.matmul %0, %1, %cst {dimension_numbers = #tpu.dot_dimension_numbers<[1], [1], [0], [0], [0, 0, 1, 0], [], []>} : vector<16x64xf32>, vector<16x64xf32>, vector<16x16xf32> -> vector<16x16xf32>
    %cst_3 = arith.constant dense<0.000000e+00> : vector<16x16xf32>
    %3 = tpu.matmul %1, %0, %cst_3 {dimension_numbers = #tpu.dot_dimension_numbers<[1], [1], [0], [0], [0, 0, 1, 0], [], []>} : vector<16x64xf32>, vector<16x64xf32>, vector<16x16xf32> -> vector<16x16xf32>
    %cst_4 = arith.constant dense<0.000000e+00> : vector<16x16xf32>
    %4 = tpu.matmul %0, %0, %cst_4 {dimension_numbers = #tpu.dot_dimension_numbers<[1], [1], [0], [0], [0, 0, 1, 0], [], []>} : vector<16x64xf32>, vector<16x64xf32>, vector<16x16xf32> -> vector<16x16xf32>
    %cst_5 = arith.constant dense<0.000000e+00> : vector<16x16xf32>
    %5 = tpu.matmul %1, %1, %cst_5 {dimension_numbers = #tpu.dot_dimension_numbers<[1], [1], [0], [0], [0, 0, 1, 0], [], []>} : vector<16x64xf32>, vector<16x64xf32>, vector<16x16xf32> -> vector<16x16xf32>
    %6 = arith.addf %4, %5 : vector<16x16xf32>
    %cst_6 = arith.constant 1.000000e+01 : f32
    %7 = vector.broadcast %cst_6 : f32 to vector<16x16xf32>
    %8 = arith.mulf %2, %7 : vector<16x16xf32>
    %cst_7 = arith.constant 1.000000e+01 : f32
    %9 = vector.broadcast %cst_7 : f32 to vector<16x16xf32>
    %10 = arith.mulf %3, %9 : vector<16x16xf32>
    %cst_8 = arith.constant dense<0xFF800000> : vector<16xf32>
    %11 = vector.multi_reduction <maximumf>, %8, %cst_8 [1] : vector<16x16xf32> to vector<16xf32>
    %12 = vector.shape_cast %11 : vector<16xf32> to vector<16x1xf32>
    %13 = vector.broadcast %12 : vector<16x1xf32> to vector<16x16xf32>
    %14 = arith.subf %8, %13 : vector<16x16xf32>
    %15 = math.exp %14 : vector<16x16xf32>
    %cst_9 = arith.constant dense<0.000000e+00> : vector<16xf32>
    %16 = vector.multi_reduction <add>, %15, %cst_9 [1] : vector<16x16xf32> to vector<16xf32>
    %17 = vector.shape_cast %16 : vector<16xf32> to vector<16x1xf32>
    %18 = math.log %17 : vector<16x1xf32>
    %19 = arith.addf %12, %18 : vector<16x1xf32>
    %cst_10 = arith.constant dense<0xFF800000> : vector<16xf32>
    %20 = vector.multi_reduction <maximumf>, %10, %cst_10 [1] : vector<16x16xf32> to vector<16xf32>
    %21 = vector.shape_cast %20 : vector<16xf32> to vector<16x1xf32>
    %22 = vector.broadcast %21 : vector<16x1xf32> to vector<16x16xf32>
    %23 = arith.subf %10, %22 : vector<16x16xf32>
    %24 = math.exp %23 : vector<16x16xf32>
    %cst_11 = arith.constant dense<0.000000e+00> : vector<16xf32>
    %25 = vector.multi_reduction <add>, %24, %cst_11 [1] : vector<16x16xf32> to vector<16xf32>
    %26 = vector.shape_cast %25 : vector<16xf32> to vector<16x1xf32>
    %27 = math.log %26 : vector<16x1xf32>
    %28 = arith.addf %21, %27 : vector<16x1xf32>
    %29 = arith.addf %8, %10 : vector<16x16xf32>
    %cst_12 = arith.constant 5.000000e+00 : f32
    %30 = vector.broadcast %cst_12 : f32 to vector<16x16xf32>
    %31 = arith.mulf %6, %30 : vector<16x16xf32>
    %cst_13 = arith.constant dense<0xFF800000> : vector<16xf32>
    %32 = vector.multi_reduction <maximumf>, %31, %cst_13 [1] : vector<16x16xf32> to vector<16xf32>
    %33 = vector.shape_cast %32 : vector<16xf32> to vector<16x1xf32>
    %34 = vector.broadcast %33 : vector<16x1xf32> to vector<16x16xf32>
    %35 = arith.subf %31, %34 : vector<16x16xf32>
    %36 = math.exp %35 : vector<16x16xf32>
    %cst_14 = arith.constant dense<0.000000e+00> : vector<16xf32>
    %37 = vector.multi_reduction <add>, %36, %cst_14 [1] : vector<16x16xf32> to vector<16xf32>
    %38 = vector.shape_cast %37 : vector<16xf32> to vector<16x1xf32>
    %39 = arith.mulf %36, %29 : vector<16x16xf32>
    %cst_15 = arith.constant dense<0.000000e+00> : vector<16xf32>
    %40 = vector.multi_reduction <add>, %39, %cst_15 [1] : vector<16x16xf32> to vector<16xf32>
    %41 = vector.shape_cast %40 : vector<16xf32> to vector<16x1xf32>
    %42 = arith.divf %41, %38 : vector<16x1xf32>
    %43 = arith.addf %19, %28 : vector<16x1xf32>
    %44 = arith.subf %43, %42 : vector<16x1xf32>
    %cst_16 = arith.constant 5.000000e-01 : f32
    %45 = vector.broadcast %cst_16 : f32 to vector<16x1xf32>
    %46 = arith.mulf %45, %44 : vector<16x1xf32>
    %c0_17 = arith.constant 0 : index
    %c0_18 = arith.constant 0 : index
    %47 = vector.load %arg4[%c0_17, %c0_18] : memref<16x1xf32, #tpu.memory_space<vmem>>, vector<16x1xf32>
    tpu.vector_store %arg4[%c0_17, %c0_18], %46 {strides = array<i32>} : memref<16x1xf32, #tpu.memory_space<vmem>>, vector<16x1xf32>,
    return
  }
  func.func @transform_0(%arg0: i32, %arg1: i32) -> (i32, i32) {
    %c0_i32 = arith.constant 0 : i32
    %c0_i32_0 = arith.constant 0 : i32
    return %c0_i32, %arg1 : i32, i32
  }
  func.func @transform_1(%arg0: i32, %arg1: i32) -> (i32, i32) {
    %c0_i32 = arith.constant 0 : i32
    %c0_i32_0 = arith.constant 0 : i32
    return %c0_i32, %arg1 : i32, i32
  }
  func.func @transform_2(%arg0: i32, %arg1: i32) -> (i32, i32) {
    %c0_i32 = arith.constant 0 : i32
    %c0_i32_0 = arith.constant 0 : i32
    return %arg0, %c0_i32 : i32, i32
  }
}

</mosaic_0001>

<llo_original>
// kernel: tpu_custom_call.1
$region0: #{tpu_custom_call.1}
  #allocation0 [shape = 'u32[]', space=smem, size = 0x4, offset = 0x4, fixed_abs, tag = 'smem constant byte address 0x4 - core index']
  #allocation1 [shape = 'u32[144,128]{1,0:T(1,128)}', space=vmem, size = 0x12000, scoped, tag = 'internal scratch']
  %s0 = inlined_call_operand.hbm [shape: f32[16,64], index: 0, kind: input, shape index: {}]
  %s1 = inlined_call_operand.hbm [shape: f32[16,64], index: 1, kind: input, shape index: {}]
  %s2 = inlined_call_operand.vmem [shape: f32[16,1], index: 2, kind: output, shape index: {}]
  %s3 = sld [smem:[#allocation0]]
  $region26: #{tpu_custom_call.1} parent=0
    _
  %s5 = ssub.s32 1, %s3
  %s6 = scalar_select 0, %s5, %s3
  $region1: #{tpu_custom_call.1} parent=0
    #allocation2 [shape = 'u8[8192]{0}', space=vmem, size = 0x2000, scoped, tag = 'input window, operand 0, single buffered']
    #allocation3 [shape = 's32[1]{0}', space=sflag, size = 0x4, scoped, tag = 'scoped memory for tpu_custom_call.1']
    #allocation4 [shape = 'u8[8192]{0}', space=vmem, size = 0x2000, scoped, tag = 'input window, operand 1, single buffered']
    #allocation5 [shape = 's32[1]{0}', space=sflag, size = 0x4, scoped, tag = 'scoped memory for tpu_custom_call.1']
    %7 = vsyncpa [#allocation3], 0
    %8 = vsyncpa [#allocation5], 0
    // Predicated region
    $region2: #{tpu_custom_call.1} parent=1 // pred_check
      _
    $region3: #{tpu_custom_call.1} parent=1 // pred_check_branch
      %10 = sbr.rel (0) target = $region5
    $region4: #{tpu_custom_call.1} parent=1 // pred_region
      %s12 = ssub.s32 256, 256
      %13 = vsyncadd [#allocation3], %s12
      %s14 = sshll.u32 [#allocation2], 4
      %s15 = int_to_ptr.vmem [resolvable:$true] %s14
      %20 = dma.hbm_to_vmem [thread:$0]  %s0, 256, %s15, [#allocation3], 128, 128, 8
    $region5: #{tpu_custom_call.1} parent=1 // pred_fallthru
      _
    // Predicated region
    $region6: #{tpu_custom_call.1} parent=1 // pred_check
      _
    $region7: #{tpu_custom_call.1} parent=1 // pred_check_branch
      %22 = sbr.rel (0) target = $region9
    $region8: #{tpu_custom_call.1} parent=1 // pred_region
      %s24 = ssub.s32 256, 256
      %25 = vsyncadd [#allocation5], %s24
      %s26 = sshll.u32 [#allocation4], 4
      %s27 = int_to_ptr.vmem [resolvable:$true] %s26
      %32 = dma.hbm_to_vmem [thread:$0]  %s1, 256, %s27, [#allocation5], 128, 128, 8
    $region9: #{tpu_custom_call.1} parent=1 // pred_fallthru
      _
    // Predicated region
    $region10: #{tpu_custom_call.1} parent=1 // pred_check
      _
    $region11: #{tpu_custom_call.1} parent=1 // pred_check_branch
      %34 = sbr.rel (0) target = $region13
    $region12: #{tpu_custom_call.1} parent=1 // pred_region
      %35 = dma.done [#allocation3], 256
    $region13: #{tpu_custom_call.1} parent=1 // pred_fallthru
      _
    // Predicated region
    $region14: #{tpu_custom_call.1} parent=1 // pred_check
      _
    $region15: #{tpu_custom_call.1} parent=1 // pred_check_branch
      %37 = sbr.rel (0) target = $region17
    $region16: #{tpu_custom_call.1} parent=1 // pred_region
      %38 = dma.done [#allocation5], 256
    $region17: #{tpu_custom_call.1} parent=1 // pred_fallthru
      _
    %v39 = vld [vmem:[#allocation2] sm:$0xff]
    %v40 = vld [vmem:[#allocation2 + $0x8] sm:$0xff]
    %v41 = vld [vmem:[#allocation4] sm:$0xff]
    %v42 = vld [vmem:[#allocation4 + $0x8] sm:$0xff]
    %vm43 = vcmask 523264
    %v45 = vsel %vm43, %v39, 0
    %v48 = vsel %vm43, %v40, 0
    %v51 = vsel %vm43, %v41, 0
    %v54 = vsel %vm43, %v42, 0
    %56 = vmatprep.subr.mxu0 0.0
    %57 = vmatpush1.xpose.msra.mxu0 0.0
    %58 = vmatprep.subr.mxu0 0.0
    %59 = vmatpush1.xpose.msra.mxu0 0.0
    %60 = vmatprep.subr.mxu0 0.0
    %61 = vmatpush1.xpose.msra.mxu0 0.0
    %62 = vmatprep.subr.mxu0 0.0
    %63 = vmatpush1.xpose.msra.mxu0 0.0
    %64 = vmatprep.subr.mxu0 0.0
    %65 = vmatpush1.xpose.msra.mxu0 0.0
    %66 = vmatprep.subr.mxu0 0.0
    %67 = vmatpush1.xpose.msra.mxu0 0.0
    %68 = vmatprep.subr.mxu0 0.0
    %69 = vmatpush1.xpose.msra.mxu0 0.0
    %70 = vmatprep.subr.mxu0 0.0
    %71 = vmatpush1.xpose.msra.mxu0 0.0
    %72 = vmatprep.subr.mxu0 0.0
    %73 = vmatpush1.xpose.msra.mxu0 0.0
    %74 = vmatprep.subr.mxu0 0.0
    %75 = vmatpush1.xpose.msra.mxu0 0.0
    %76 = vmatprep.subr.mxu0 0.0
    %77 = vmatpush1.xpose.msra.mxu0 0.0
    %78 = vmatprep.subr.mxu0 0.0
    %79 = vmatpush1.xpose.msra.mxu0 0.0
    %80 = vmatprep.subr.mxu0 0.0
    %81 = vmatpush1.xpose.msra.mxu0 0.0
    %82 = vmatprep.subr.mxu0 0.0
    %83 = vmatpush1.xpose.msra.mxu0 0.0
    %84 = vmatprep.subr.mxu0 0.0
    %85 = vmatpush1.xpose.msra.mxu0 %v54
    %86 = vmatprep.subr.mxu0 0.0
    %87 = vmatpush1.xpose.msra.mxu0 %v51
    %88 = vmatprep.subr.mxu0 0.0
    %89 = vmatpush2.xpose.msra.mxu0 0.0
    %90 = vmatprep.subr.mxu0 0.0
    %91 = vmatpush2.xpose.msra.mxu0 0.0
    %92 = vmatprep.subr.mxu0 0.0
    %93 = vmatpush2.xpose.msra.mxu0 0.0
    %94 = vmatprep.subr.mxu0 0.0
    %95 = vmatpush2.xpose.msra.mxu0 0.0
    %96 = vmatprep.subr.mxu0 0.0
    %97 = vmatpush2.xpose.msra.mxu0 0.0
    %98 = vmatprep.subr.mxu0 0.0
    %99 = vmatpush2.xpose.msra.mxu0 0.0
    %100 = vmatprep.subr.mxu0 0.0
    %101 = vmatpush2.xpose.msra.mxu0 0.0
    %102 = vmatprep.subr.mxu0 0.0
    %103 = vmatpush2.xpose.msra.mxu0 0.0
    %104 = vmatprep.subr.mxu0 0.0
    %105 = vmatpush2.xpose.msra.mxu0 0.0
    %106 = vmatprep.subr.mxu0 0.0
    %107 = vmatpush2.xpose.msra.mxu0 0.0
    %108 = vmatprep.subr.mxu0 0.0
    %109 = vmatpush2.xpose.msra.mxu0 0.0
    %110 = vmatprep.subr.mxu0 0.0
    %111 = vmatpush2.xpose.msra.mxu0 0.0
    %112 = vmatprep.subr.mxu0 0.0
    %113 = vmatpush2.xpose.msra.mxu0 0.0
    %114 = vmatprep.subr.mxu0 0.0
    %115 = vmatpush2.xpose.msra.mxu0 0.0
    %116 = vmatprep.subr.mxu0 0.0
    %117 = vmatpush2.xpose.msra.mxu0 0.0
    %118 = vmatprep.subr.mxu0 0.0
    %119 = vmatpush2.xpose.msra.mxu0 0.0
    %120 = vmatprep.mubr.f32.mxu0 0.0
    %121 = vmatmul.mubr.f32.gmra.mxu0 %v45
    %v122 = vpop.f32.mrf.mxu0
    %v123 = vadd.f32 0.0, %v122
    %v124 = vpop.f32.mrf.mxu0
    %125 = vmatprep.mubr.f32.mxu0 0.0
    %126 = vmatmul.mubr.f32.gmra.mxu0 %v48
    %v127 = vpop.f32.mrf.mxu0
    %v128 = vadd.f32 0.0, %v127
    %v129 = vpop.f32.mrf.mxu0
    %130 = vdwg.mxu0
    %131 = vmatprep.subr.mxu0 0.0
    %132 = vmatpush1.xpose.msra.mxu0 0.0
    %133 = vmatprep.subr.mxu0 0.0
    %134 = vmatpush1.xpose.msra.mxu0 0.0
    %135 = vmatprep.subr.mxu0 0.0
    %136 = vmatpush1.xpose.msra.mxu0 0.0
    %137 = vmatprep.subr.mxu0 0.0
    %138 = vmatpush1.xpose.msra.mxu0 0.0
    %139 = vmatprep.subr.mxu0 0.0
    %140 = vmatpush1.xpose.msra.mxu0 0.0
    %141 = vmatprep.subr.mxu0 0.0
    %142 = vmatpush1.xpose.msra.mxu0 0.0
    %143 = vmatprep.subr.mxu0 0.0
    %144 = vmatpush1.xpose.msra.mxu0 0.0
    %145 = vmatprep.subr.mxu0 0.0
    %146 = vmatpush1.xpose.msra.mxu0 0.0
    %147 = vmatprep.subr.mxu0 0.0
    %148 = vmatpush1.xpose.msra.mxu0 0.0
    %149 = vmatprep.subr.mxu0 0.0
    %150 = vmatpush1.xpose.msra.mxu0 0.0
    %151 = vmatprep.subr.mxu0 0.0
    %152 = vmatpush1.xpose.msra.mxu0 0.0
    %153 = vmatprep.subr.mxu0 0.0
    %154 = vmatpush1.xpose.msra.mxu0 0.0
    %155 = vmatprep.subr.mxu0 0.0
    %156 = vmatpush1.xpose.msra.mxu0 0.0
    %157 = vmatprep.subr.mxu0 0.0
    %158 = vmatpush1.xpose.msra.mxu0 0.0
    %159 = vmatprep.subr.mxu0 0.0
    %160 = vmatpush1.xpose.msra.mxu0 %v48
    %161 = vmatprep.subr.mxu0 0.0
    %162 = vmatpush1.xpose.msra.mxu0 %v45
    %163 = vmatprep.subr.mxu0 0.0
    %164 = vmatpush2.xpose.msra.mxu0 0.0
    %165 = vmatprep.subr.mxu0 0.0
    %166 = vmatpush2.xpose.msra.mxu0 0.0
    %167 = vmatprep.subr.mxu0 0.0
    %168 = vmatpush2.xpose.msra.mxu0 0.0
    %169 = vmatprep.subr.mxu0 0.0
    %170 = vmatpush2.xpose.msra.mxu0 0.0
    %171 = vmatprep.subr.mxu0 0.0
    %172 = vmatpush2.xpose.msra.mxu0 0.0
    %173 = vmatprep.subr.mxu0 0.0
    %174 = vmatpush2.xpose.msra.mxu0 0.0
    %175 = vmatprep.subr.mxu0 0.0
    %176 = vmatpush2.xpose.msra.mxu0 0.0
    %177 = vmatprep.subr.mxu0 0.0
    %178 = vmatpush2.xpose.msra.mxu0 0.0
    %179 = vmatprep.subr.mxu0 0.0
    %180 = vmatpush2.xpose.msra.mxu0 0.0
    %181 = vmatprep.subr.mxu0 0.0
    %182 = vmatpush2.xpose.msra.mxu0 0.0
    %183 = vmatprep.subr.mxu0 0.0
    %184 = vmatpush2.xpose.msra.mxu0 0.0
    %185 = vmatprep.subr.mxu0 0.0
    %186 = vmatpush2.xpose.msra.mxu0 0.0
    %187 = vmatprep.subr.mxu0 0.0
    %188 = vmatpush2.xpose.msra.mxu0 0.0
    %189 = vmatprep.subr.mxu0 0.0
    %190 = vmatpush2.xpose.msra.mxu0 0.0
    %191 = vmatprep.subr.mxu0 0.0
    %192 = vmatpush2.xpose.msra.mxu0 0.0
    %193 = vmatprep.subr.mxu0 0.0
    %194 = vmatpush2.xpose.msra.mxu0 0.0
    %195 = vmatprep.mubr.f32.mxu0 0.0
    %196 = vmatmul.mubr.f32.gmra.mxu0 %v51
    %v197 = vpop.f32.mrf.mxu0
    %v198 = vadd.f32 0.0, %v197
    %v199 = vpop.f32.mrf.mxu0
    %200 = vmatprep.mubr.f32.mxu0 0.0
    %201 = vmatmul.mubr.f32.gmra.mxu0 %v54
    %v202 = vpop.f32.mrf.mxu0
    %v203 = vadd.f32 0.0, %v202
    %v204 = vpop.f32.mrf.mxu0
    %205 = vdwg.mxu0
    %206 = vmatprep.subr.mxu0 0.0
    %207 = vmatpush1.xpose.msra.mxu0 0.0
    %208 = vmatprep.subr.mxu0 0.0
    %209 = vmatpush1.xpose.msra.mxu0 0.0
    %210 = vmatprep.subr.mxu0 0.0
    %211 = vmatpush1.xpose.msra.mxu0 0.0
    %212 = vmatprep.subr.mxu0 0.0
    %213 = vmatpush1.xpose.msra.mxu0 0.0
    %214 = vmatprep.subr.mxu0 0.0
    %215 = vmatpush1.xpose.msra.mxu0 0.0
    %216 = vmatprep.subr.mxu0 0.0
    %217 = vmatpush1.xpose.msra.mxu0 0.0
    %218 = vmatprep.subr.mxu0 0.0
    %219 = vmatpush1.xpose.msra.mxu0 0.0
    %220 = vmatprep.subr.mxu0 0.0
    %221 = vmatpush1.xpose.msra.mxu0 0.0
    %222 = vmatprep.subr.mxu0 0.0
    %223 = vmatpush1.xpose.msra.mxu0 0.0
    %224 = vmatprep.subr.mxu0 0.0
    %225 = vmatpush1.xpose.msra.mxu0 0.0
    %226 = vmatprep.subr.mxu0 0.0
    %227 = vmatpush1.xpose.msra.mxu0 0.0
    %228 = vmatprep.subr.mxu0 0.0
    %229 = vmatpush1.xpose.msra.mxu0 0.0
    %230 = vmatprep.subr.mxu0 0.0
    %231 = vmatpush1.xpose.msra.mxu0 0.0
    %232 = vmatprep.subr.mxu0 0.0
    %233 = vmatpush1.xpose.msra.mxu0 0.0
    %234 = vmatprep.subr.mxu0 0.0
    %235 = vmatpush1.xpose.msra.mxu0 %v54
    %236 = vmatprep.subr.mxu0 0.0
    %237 = vmatpush1.xpose.msra.mxu0 %v51
    %238 = vmatprep.subr.mxu0 0.0
    %239 = vmatpush2.xpose.msra.mxu0 0.0
    %240 = vmatprep.subr.mxu0 0.0
    %241 = vmatpush2.xpose.msra.mxu0 0.0
    %242 = vmatprep.subr.mxu0 0.0
    %243 = vmatpush2.xpose.msra.mxu0 0.0
    %244 = vmatprep.subr.mxu0 0.0
    %245 = vmatpush2.xpose.msra.mxu0 0.0
    %246 = vmatprep.subr.mxu0 0.0
    %247 = vmatpush2.xpose.msra.mxu0 0.0
    %248 = vmatprep.subr.mxu0 0.0
    %249 = vmatpush2.xpose.msra.mxu0 0.0
    %250 = vmatprep.subr.mxu0 0.0
    %251 = vmatpush2.xpose.msra.mxu0 0.0
    %252 = vmatprep.subr.mxu0 0.0
    %253 = vmatpush2.xpose.msra.mxu0 0.0
    %254 = vmatprep.subr.mxu0 0.0
    %255 = vmatpush2.xpose.msra.mxu0 0.0
    %256 = vmatprep.subr.mxu0 0.0
    %257 = vmatpush2.xpose.msra.mxu0 0.0
    %258 = vmatprep.subr.mxu0 0.0
    %259 = vmatpush2.xpose.msra.mxu0 0.0
    %260 = vmatprep.subr.mxu0 0.0
    %261 = vmatpush2.xpose.msra.mxu0 0.0
    %262 = vmatprep.subr.mxu0 0.0
    %263 = vmatpush2.xpose.msra.mxu0 0.0
    %264 = vmatprep.subr.mxu0 0.0
    %265 = vmatpush2.xpose.msra.mxu0 0.0
    %266 = vmatprep.subr.mxu0 0.0
    %267 = vmatpush2.xpose.msra.mxu0 0.0
    %268 = vmatprep.subr.mxu0 0.0
    %269 = vmatpush2.xpose.msra.mxu0 0.0
    %270 = vmatprep.mubr.f32.mxu0 0.0
    %271 = vmatmul.mubr.f32.gmra.mxu0 %v51
    %v272 = vpop.f32.mrf.mxu0
    %v273 = vadd.f32 0.0, %v272
    %v274 = vpop.f32.mrf.mxu0
    %275 = vmatprep.mubr.f32.mxu0 0.0
    %276 = vmatmul.mubr.f32.gmra.mxu0 %v54
    %v277 = vpop.f32.mrf.mxu0
    %v278 = vadd.f32 0.0, %v277
    %v279 = vpop.f32.mrf.mxu0
    %280 = vdwg.mxu0
    %281 = vmatprep.subr.mxu0 0.0
    %282 = vmatpush1.xpose.msra.mxu0 0.0
    %283 = vmatprep.subr.mxu0 0.0
    %284 = vmatpush1.xpose.msra.mxu0 0.0
    %285 = vmatprep.subr.mxu0 0.0
    %286 = vmatpush1.xpose.msra.mxu0 0.0
    %287 = vmatprep.subr.mxu0 0.0
    %288 = vmatpush1.xpose.msra.mxu0 0.0
    %289 = vmatprep.subr.mxu0 0.0
    %290 = vmatpush1.xpose.msra.mxu0 0.0
    %291 = vmatprep.subr.mxu0 0.0
    %292 = vmatpush1.xpose.msra.mxu0 0.0
    %293 = vmatprep.subr.mxu0 0.0
    %294 = vmatpush1.xpose.msra.mxu0 0.0
    %295 = vmatprep.subr.mxu0 0.0
    %296 = vmatpush1.xpose.msra.mxu0 0.0
    %297 = vmatprep.subr.mxu0 0.0
    %298 = vmatpush1.xpose.msra.mxu0 0.0
    %299 = vmatprep.subr.mxu0 0.0
    %300 = vmatpush1.xpose.msra.mxu0 0.0
    %301 = vmatprep.subr.mxu0 0.0
    %302 = vmatpush1.xpose.msra.mxu0 0.0
    %303 = vmatprep.subr.mxu0 0.0
    %304 = vmatpush1.xpose.msra.mxu0 0.0
    %305 = vmatprep.subr.mxu0 0.0
    %306 = vmatpush1.xpose.msra.mxu0 0.0
    %307 = vmatprep.subr.mxu0 0.0
    %308 = vmatpush1.xpose.msra.mxu0 0.0
    %309 = vmatprep.subr.mxu0 0.0
    %310 = vmatpush1.xpose.msra.mxu0 %v48
    %311 = vmatprep.subr.mxu0 0.0
    %312 = vmatpush1.xpose.msra.mxu0 %v45
    %313 = vmatprep.subr.mxu0 0.0
    %314 = vmatpush2.xpose.msra.mxu0 0.0
    %315 = vmatprep.subr.mxu0 0.0
    %316 = vmatpush2.xpose.msra.mxu0 0.0
    %317 = vmatprep.subr.mxu0 0.0
    %318 = vmatpush2.xpose.msra.mxu0 0.0
    %319 = vmatprep.subr.mxu0 0.0
    %320 = vmatpush2.xpose.msra.mxu0 0.0
    %321 = vmatprep.subr.mxu0 0.0
    %322 = vmatpush2.xpose.msra.mxu0 0.0
    %323 = vmatprep.subr.mxu0 0.0
    %324 = vmatpush2.xpose.msra.mxu0 0.0
    %325 = vmatprep.subr.mxu0 0.0
    %326 = vmatpush2.xpose.msra.mxu0 0.0
    %327 = vmatprep.subr.mxu0 0.0
    %328 = vmatpush2.xpose.msra.mxu0 0.0
    %329 = vmatprep.subr.mxu0 0.0
    %330 = vmatpush2.xpose.msra.mxu0 0.0
    %331 = vmatprep.subr.mxu0 0.0
    %332 = vmatpush2.xpose.msra.mxu0 0.0
    %333 = vmatprep.subr.mxu0 0.0
    %334 = vmatpush2.xpose.msra.mxu0 0.0
    %335 = vmatprep.subr.mxu0 0.0
    %336 = vmatpush2.xpose.msra.mxu0 0.0
    %337 = vmatprep.subr.mxu0 0.0
    %338 = vmatpush2.xpose.msra.mxu0 0.0
    %339 = vmatprep.subr.mxu0 0.0
    %340 = vmatpush2.xpose.msra.mxu0 0.0
    %341 = vmatprep.subr.mxu0 0.0
    %342 = vmatpush2.xpose.msra.mxu0 0.0
    %343 = vmatprep.subr.mxu0 0.0
    %344 = vmatpush2.xpose.msra.mxu0 0.0
    %345 = vmatprep.mubr.f32.mxu0 0.0
    %346 = vmatmul.mubr.f32.gmra.mxu0 %v45
    %v347 = vpop.f32.mrf.mxu0
    %v348 = vadd.f32 %v273, %v347
    %v349 = vpop.f32.mrf.mxu0
    %350 = vmatprep.mubr.f32.mxu0 0.0
    %351 = vmatmul.mubr.f32.gmra.mxu0 %v48
    %v352 = vpop.f32.mrf.mxu0
    %v353 = vadd.f32 %v278, %v352
    %v354 = vpop.f32.mrf.mxu0
    %355 = vdwg.mxu0
    %v356 = vmul.f32 %v123, 10.0
    %v357 = vmul.f32 %v128, 10.0
    %v358 = vmul.f32 %v198, 10.0
    %v359 = vmul.f32 %v203, 10.0
    %vm360 = vcmask 130048
    %v361 = vsel %vm360, %v356, -inf
    %362 = vmax.xlane.f32.xlu0 %v361
    %v363 = vpop.xlane.xlu0 %362
    %v364 = vsel %vm360, %v357, -inf
    %365 = vmax.xlane.f32.xlu0 %v364
    %v366 = vpop.xlane.xlu0 %365
    %v367 = vsub.f32 %v356, %v363
    %v368 = vsub.f32 %v357, %v366
    %v369 = vmul.f32 %v367, 1.442695
    %v370 = vpow.pop %v369
    %v371 = vmul.f32 %v368, 1.442695
    %v372 = vpow.pop %v371
    %v373 = vsel %vm360, %v370, 0.0
    %374 = vadd.xlane.f32.xlu0 %v373
    %v375 = vpop.xlane.xlu0 %374
    %v376 = vsel %vm360, %v372, 0.0
    %377 = vadd.xlane.f32.xlu0 %v376
    %v378 = vpop.xlane.xlu0 %377
    %v379 = vlog2.pop %v375
    %v380 = vmul.f32 %v379, 0.6931472
    %v381 = vlog2.pop %v378
    %v382 = vmul.f32 %v381, 0.6931472
    %v383 = vadd.f32 %v363, %v380
    %v384 = vadd.f32 %v366, %v382
    %v385 = vsel %vm360, %v358, -inf
    %386 = vmax.xlane.f32.xlu0 %v385
    %v387 = vpop.xlane.xlu0 %386
    %v388 = vsel %vm360, %v359, -inf
    %389 = vmax.xlane.f32.xlu0 %v388
    %v390 = vpop.xlane.xlu0 %389
    %v391 = vsub.f32 %v358, %v387
    %v392 = vsub.f32 %v359, %v390
    %v393 = vmul.f32 %v391, 1.442695
    %v394 = vpow.pop %v393
    %v395 = vmul.f32 %v392, 1.442695
    %v396 = vpow.pop %v395
    %v397 = vsel %vm360, %v394, 0.0
    %398 = vadd.xlane.f32.xlu0 %v397
    %v399 = vpop.xlane.xlu0 %398
    %v400 = vsel %vm360, %v396, 0.0
    %401 = vadd.xlane.f32.xlu0 %v400
    %v402 = vpop.xlane.xlu0 %401
    %v403 = vlog2.pop %v399
    %v404 = vmul.f32 %v403, 0.6931472
    %v405 = vlog2.pop %v402
    %v406 = vmul.f32 %v405, 0.6931472
    %v407 = vadd.f32 %v387, %v404
    %v408 = vadd.f32 %v390, %v406
    %v409 = vadd.f32 %v356, %v358
    %v410 = vadd.f32 %v357, %v359
    %v411 = vmul.f32 %v348, 5.0
    %v412 = vmul.f32 %v353, 5.0
    %v413 = vsel %vm360, %v411, -inf
    %414 = vmax.xlane.f32.xlu0 %v413
    %v415 = vpop.xlane.xlu0 %414
    %v416 = vsel %vm360, %v412, -inf
    %417 = vmax.xlane.f32.xlu0 %v416
    %v418 = vpop.xlane.xlu0 %417
    %v419 = vsub.f32 %v411, %v415
    %v420 = vsub.f32 %v412, %v418
    %v421 = vmul.f32 %v419, 1.442695
    %v422 = vpow.pop %v421
    %v423 = vmul.f32 %v420, 1.442695
    %v424 = vpow.pop %v423
    %v425 = vsel %vm360, %v422, 0.0
    %426 = vadd.xlane.f32.xlu0 %v425
    %v427 = vpop.xlane.xlu0 %426
    %v428 = vsel %vm360, %v424, 0.0
    %429 = vadd.xlane.f32.xlu0 %v428
    %v430 = vpop.xlane.xlu0 %429
    %v431 = vmul.f32 %v422, %v409
    %v432 = vmul.f32 %v424, %v410
    %v433 = vsel %vm360, %v431, 0.0
    %434 = vadd.xlane.f32.xlu0 %v433
    %v435 = vpop.xlane.xlu0 %434
    %v436 = vsel %vm360, %v432, 0.0
    %437 = vadd.xlane.f32.xlu0 %v436
    %v438 = vpop.xlane.xlu0 %437
    %v439 = vrcp.pop %v427
    %v440 = vmul.f32 %v435, %v439
    %v441 = vrcp.pop %v430
    %v442 = vmul.f32 %v438, %v441
    %v443 = vadd.f32 %v383, %v407
    %v444 = vadd.f32 %v384, %v408
    %v445 = vsub.f32 %v443, %v440
    %v446 = vsub.f32 %v444, %v442
    %v447 = vmul.f32 %v445, 0.5
    %v448 = vmul.f32 %v446, 0.5
    %vm449 = vcmask 7168
    %450 = vst.msk [vmem:[%s2] sm:$0xff] %vm449, %v447
    %451 = vst.msk [vmem:[%s2 + $0x8] sm:$0xff] %vm449, %v448
    // Predicated region
    $region18: #{tpu_custom_call.1} parent=1 // pred_check
      _
    $region19: #{tpu_custom_call.1} parent=1 // pred_check_branch
      %453 = sbr.rel (0) target = $region21
    $region20: #{tpu_custom_call.1} parent=1 // pred_region
      _
    $region21: #{tpu_custom_call.1} parent=1 // pred_fallthru
      _
    // Predicated region
    $region22: #{tpu_custom_call.1} parent=1 // pred_check
      _
    $region23: #{tpu_custom_call.1} parent=1 // pred_check_branch
      %455 = sbr.rel (0) target = $region25
    $region24: #{tpu_custom_call.1} parent=1 // pred_region
      _
    $region25: #{tpu_custom_call.1} parent=1 // pred_fallthru
      _
    %456 = vsyncpa [#allocation3], 1
    %457 = vsyncpa [#allocation5], 1

</llo_original>
